<compile_context>
chip_gen: v7x
topology: tpu7x:2x2x1
jax: 0.10.0
libtpu: 0.0.40
codegen_flags: <defaults>
</compile_context>

<pallas_src>
import functools

import jax
import jax.numpy as jnp
from jax.experimental import pallas as pl
from jax.experimental.pallas import tpu as pltpu


def _autoencoder_kernel(x_ref, we_ref, be_ref, wd_ref, bd_ref, out_ref):
    """Fused encoder->decoder forward for one batch tile.

    x_ref:  (TB, IN)     bf16 flattened image-sequence tile
    we_ref: (IN, Hp)     bf16 encoder weight (resident)
    be_ref: (1,  Hp)     f32 encoder bias    (resident)
    wd_ref: (Hp, IN)     bf16 decoder weight (resident)
    bd_ref: (1,  IN)     f32 decoder bias    (resident)
    out_ref:(TB, IN)     f32 reconstruction tile
    """
    # encoder: h = relu(x @ We + be)   (MXU bf16 matmul, f32 accumulate)
    h = jnp.dot(x_ref[...], we_ref[...], preferred_element_type=jnp.float32)
    h = jnp.maximum(h + be_ref[...], 0.0)

    # decoder: x_hat = h @ Wd + bd     (cast h back to bf16 for the MXU)
    y = jnp.dot(h.astype(wd_ref.dtype), wd_ref[...],
                preferred_element_type=jnp.float32)
    y = y + bd_ref[...]

    out_ref[...] = y.astype(out_ref.dtype)


def _round_up(n, m):
    return ((n + m - 1) // m) * m


@functools.partial(jax.jit, static_argnames=("block_b",))
def imgseq_autoencoder_forward(x, w_enc, b_enc, w_dec, b_dec, *, block_b=512):
    """x: [B, S, D] float32. Returns x_hat with the same shape/dtype."""
    B, S, D = x.shape
    IN = S * D
    H = w_enc.shape[1]

    # --- lane-pad the hidden dim to a multiple of 128 (exact no-op padding) --
    Hp = _round_up(max(H, 128), 128)
    if Hp != H:
        w_enc = jnp.pad(w_enc, ((0, 0), (0, Hp - H)))
        b_enc = jnp.pad(b_enc, ((0, Hp - H),))
        w_dec = jnp.pad(w_dec, ((0, Hp - H), (0, 0)))

    # --- batch tile: multiple of 8 sublanes, capped at block_b rows ----------
    TB = min(block_b, _round_up(B, 8))
    Bp = _round_up(B, TB)

    x_flat = x.reshape(B, IN)
    if Bp != B:
        x_flat = jnp.pad(x_flat, ((0, Bp - B), (0, 0)))

    # bf16 operands (halves HBM traffic; native MXU path), f32 accumulation.
    x_bf = x_flat.astype(jnp.bfloat16)
    we_bf = w_enc.astype(jnp.bfloat16)
    wd_bf = w_dec.astype(jnp.bfloat16)
    be2 = b_enc.reshape(1, Hp).astype(jnp.float32)
    bd2 = b_dec.reshape(1, IN).astype(jnp.float32)

    grid = (Bp // TB,)

    out_flat = pl.pallas_call(
        _autoencoder_kernel,
        out_shape=jax.ShapeDtypeStruct((Bp, IN), x.dtype),
        grid=grid,
        in_specs=[
            pl.BlockSpec((TB, IN), lambda i: (i, 0)),   # x: batch-tiled
            pl.BlockSpec((IN, Hp), lambda i: (0, 0)),   # We: resident
            pl.BlockSpec((1, Hp), lambda i: (0, 0)),    # be: resident
            pl.BlockSpec((Hp, IN), lambda i: (0, 0)),   # Wd: resident
            pl.BlockSpec((1, IN), lambda i: (0, 0)),    # bd: resident
        ],
        out_specs=pl.BlockSpec((TB, IN), lambda i: (i, 0)),
        compiler_params=pltpu.CompilerParams(
            dimension_semantics=("parallel",),
            vmem_limit_bytes=48 << 20,  # headroom for resident weights +
                                        # double-buffered activation tiles,
                                        # safe on v7x's 64 MiB per-TC VMEM
        ),
    )(x_bf, we_bf, be2, wd_bf, bd2)

    return out_flat[:B].reshape(B, S, D)


def _reference_forward(x, w_enc, b_enc, w_dec, b_dec):
    """Reference with the same bf16-operand / f32-accumulate numerics."""
    B, S, D = x.shape
    f32 = jnp.float32
    xf = x.reshape(B, S * D).astype(jnp.bfloat16).astype(f32)
    we = w_enc.astype(jnp.bfloat16).astype(f32)
    wd = w_dec.astype(jnp.bfloat16).astype(f32)
    h = jnp.maximum(xf @ we + b_enc, 0.0)
    h = h.astype(jnp.bfloat16).astype(f32)
    y = h @ wd + b_dec
    return y.reshape(B, S, D)


if __name__ == "__main__":
    # Small shapes consistent with the image-sequence autoencoder:
    # batch=2, seq=8 images, feat=16 per image -> IN=128, hidden=32.
    B, S, D, H = 2, 8, 16, 32
    IN = S * D

    key = jax.random.PRNGKey(0)
    kx, kwe, kbe, kwd, kbd = jax.random.split(key, 5)

    x = jax.random.normal(kx, (B, S, D), dtype=jnp.float32)
    w_enc = jax.random.normal(kwe, (IN, H), dtype=jnp.float32) * 0.05
    b_enc = jax.random.normal(kbe, (H,), dtype=jnp.float32) * 0.01
    w_dec = jax.random.normal(kwd, (H, IN), dtype=jnp.float32) * 0.05
    b_dec = jax.random.normal(kbd, (IN,), dtype=jnp.float32) * 0.01

    x_hat = imgseq_autoencoder_forward(x, w_enc, b_enc, w_dec, b_dec)
    x_hat = jax.block_until_ready(x_hat)

    x_ref = _reference_forward(x, w_enc, b_enc, w_dec, b_dec)
    assert x_hat.shape == x.shape
    assert x_hat.dtype == x.dtype
    assert jnp.allclose(x_hat, x_ref, atol=2e-3, rtol=2e-3), (
        float(jnp.max(jnp.abs(x_hat - x_ref)))
    )

    print("KERNEL_OK")
</pallas_src>

<mosaic_0001>
module attributes {stable_mosaic.version = 11 : i64} {
  func.func @_autoencoder_kernel(%arg0: i32, %arg1: memref<8x128xbf16, #tpu.memory_space<vmem>>, %arg2: memref<128x128xbf16, #tpu.memory_space<vmem>>, %arg3: memref<1x128xf32, #tpu.memory_space<vmem>>, %arg4: memref<128x128xbf16, #tpu.memory_space<vmem>>, %arg5: memref<1x128xf32, #tpu.memory_space<vmem>>, %arg6: memref<8x128xf32, #tpu.memory_space<vmem>>) attributes {dimension_semantics = [#tpu.dimension_semantics<parallel>], iteration_bounds = array<i64: 1>, scalar_prefetch = 0 : i64, scratch_operands = 0 : i64, tpu.core_type = #tpu.core_type<tc>, window_params = [{transform_indices = @transform_0, window_bounds = array<i64: 8, 128>}, {pipeline_mode = #tpu.pipeline_mode<synchronous>, transform_indices = @transform_1, window_bounds = array<i64: 128, 128>}, {pipeline_mode = #tpu.pipeline_mode<synchronous>, transform_indices = @transform_2, window_bounds = array<i64: 1, 128>}, {pipeline_mode = #tpu.pipeline_mode<synchronous>, transform_indices = @transform_3, window_bounds = array<i64: 128, 128>}, {pipeline_mode = #tpu.pipeline_mode<synchronous>, transform_indices = @transform_4, window_bounds = array<i64: 1, 128>}, {transform_indices = @transform_5, window_bounds = array<i64: 8, 128>}]} {
    %c0 = arith.constant 0 : index
    %c0_0 = arith.constant 0 : index
    %0 = vector.load %arg1[%c0, %c0_0] : memref<8x128xbf16, #tpu.memory_space<vmem>>, vector<8x128xbf16>
    %c0_1 = arith.constant 0 : index
    %c0_2 = arith.constant 0 : index
    %1 = vector.load %arg2[%c0_1, %c0_2] : memref<128x128xbf16, #tpu.memory_space<vmem>>, vector<128x128xbf16>
    %cst = arith.constant dense<0.000000e+00> : vector<8x128xf32>
    %2 = tpu.matmul %0, %1, %cst {dimension_numbers = #tpu.dot_dimension_numbers<[1], [0], [0], [1], [0, 0, 1, 1], [], []>} : vector<8x128xbf16>, vector<128x128xbf16>, vector<8x128xf32> -> vector<8x128xf32>
    %c0_3 = arith.constant 0 : index
    %c0_4 = arith.constant 0 : index
    %3 = vector.load %arg3[%c0_3, %c0_4] : memref<1x128xf32, #tpu.memory_space<vmem>>, vector<1x128xf32>
    %4 = vector.broadcast %3 : vector<1x128xf32> to vector<8x128xf32>
    %5 = arith.addf %2, %4 : vector<8x128xf32>
    %cst_5 = arith.constant 0.000000e+00 : f32
    %6 = vector.broadcast %cst_5 : f32 to vector<8x128xf32>
    %7 = arith.maximumf %5, %6 : vector<8x128xf32>
    %8 = arith.truncf %7 : vector<8x128xf32> to vector<8x128xbf16>
    %c0_6 = arith.constant 0 : index
    %c0_7 = arith.constant 0 : index
    %9 = vector.load %arg4[%c0_6, %c0_7] : memref<128x128xbf16, #tpu.memory_space<vmem>>, vector<128x128xbf16>
    %cst_8 = arith.constant dense<0.000000e+00> : vector<8x128xf32>
    %10 = tpu.matmul %8, %9, %cst_8 {dimension_numbers = #tpu.dot_dimension_numbers<[1], [0], [0], [1], [0, 0, 1, 1], [], []>} : vector<8x128xbf16>, vector<128x128xbf16>, vector<8x128xf32> -> vector<8x128xf32>
    %c0_9 = arith.constant 0 : index
    %c0_10 = arith.constant 0 : index
    %11 = vector.load %arg5[%c0_9, %c0_10] : memref<1x128xf32, #tpu.memory_space<vmem>>, vector<1x128xf32>
    %12 = vector.broadcast %11 : vector<1x128xf32> to vector<8x128xf32>
    %13 = arith.addf %10, %12 : vector<8x128xf32>
    %c0_11 = arith.constant 0 : index
    %c0_12 = arith.constant 0 : index
    %14 = vector.load %arg6[%c0_11, %c0_12] : memref<8x128xf32, #tpu.memory_space<vmem>>, vector<8x128xf32>
    tpu.vector_store %arg6[%c0_11, %c0_12], %13 {strides = array<i32>} : memref<8x128xf32, #tpu.memory_space<vmem>>, vector<8x128xf32>,
    return
  }
  func.func @transform_0(%arg0: i32) -> (i32, i32) {
    %c0_i32 = arith.constant 0 : i32
    %c0_i32_0 = arith.constant 0 : i32
    return %arg0, %c0_i32 : i32, i32
  }
  func.func @transform_1(%arg0: i32) -> (i32, i32) {
    %c0_i32 = arith.constant 0 : i32
    %c0_i32_0 = arith.constant 0 : i32
    %c0_i32_1 = arith.constant 0 : i32
    return %c0_i32, %c0_i32_0 : i32, i32
  }
  func.func @transform_2(%arg0: i32) -> (i32, i32) {
    %c0_i32 = arith.constant 0 : i32
    %c0_i32_0 = arith.constant 0 : i32
    %c0_i32_1 = arith.constant 0 : i32
    return %c0_i32, %c0_i32_0 : i32, i32
  }
  func.func @transform_3(%arg0: i32) -> (i32, i32) {
    %c0_i32 = arith.constant 0 : i32
    %c0_i32_0 = arith.constant 0 : i32
    %c0_i32_1 = arith.constant 0 : i32
    return %c0_i32, %c0_i32_0 : i32, i32
  }
  func.func @transform_4(%arg0: i32) -> (i32, i32) {
    %c0_i32 = arith.constant 0 : i32
    %c0_i32_0 = arith.constant 0 : i32
    %c0_i32_1 = arith.constant 0 : i32
    return %c0_i32, %c0_i32_0 : i32, i32
  }
  func.func @transform_5(%arg0: i32) -> (i32, i32) {
    %c0_i32 = arith.constant 0 : i32
    %c0_i32_0 = arith.constant 0 : i32
    return %arg0, %c0_i32 : i32, i32
  }
}

</mosaic_0001>

<llo_original>
// kernel: imgseq_autoencoder_forward.1
$region0: #{imgseq_autoencoder_forward.1}
  #allocation0 [shape = 'u32[]', space=smem, size = 0x4, offset = 0x4, fixed_abs, tag = 'smem constant byte address 0x4 - core index']
  #allocation1 [shape = 'u32[144,128]{1,0:T(1,128)}', space=vmem, size = 0x12000, scoped, tag = 'internal scratch']
  %s0 = inlined_call_operand.vmem [shape: bf16[8,128], index: 0, kind: input, shape index: {}]
  %s1 = inlined_call_operand.vmem [shape: bf16[128,128], index: 1, kind: input, shape index: {}]
  %s2 = inlined_call_operand.vmem [shape: f32[1,128], index: 2, kind: input, shape index: {}]
  %s3 = inlined_call_operand.vmem [shape: bf16[128,128], index: 3, kind: input, shape index: {}]
  %s4 = inlined_call_operand.vmem [shape: f32[1,128], index: 4, kind: input, shape index: {}]
  %s5 = inlined_call_operand.vmem [shape: f32[8,128], index: 5, kind: output, shape index: {}]
  %s6 = sld [smem:[#allocation0]]
  $region30: #{imgseq_autoencoder_forward.1} parent=0
    _
  %s8 = ssub.s32 1, %s6
  %s9 = scalar_select 0, %s8, %s6
  // Predicated region
  $region2: #{imgseq_autoencoder_forward.1} parent=0 // pred_check
    _
  $region3: #{imgseq_autoencoder_forward.1} parent=0 // pred_check_branch
    %11 = sbr.rel (0) target = $region5
  $region4: #{imgseq_autoencoder_forward.1} parent=0 // pred_region
    _
  $region5: #{imgseq_autoencoder_forward.1} parent=0 // pred_fallthru
    _
  // Predicated region
  $region6: #{imgseq_autoencoder_forward.1} parent=0 // pred_check
    _
  $region7: #{imgseq_autoencoder_forward.1} parent=0 // pred_check_branch
    %13 = sbr.rel (0) target = $region9
  $region8: #{imgseq_autoencoder_forward.1} parent=0 // pred_region
    _
  $region9: #{imgseq_autoencoder_forward.1} parent=0 // pred_fallthru
    _
  // Predicated region
  $region10: #{imgseq_autoencoder_forward.1} parent=0 // pred_check
    _
  $region11: #{imgseq_autoencoder_forward.1} parent=0 // pred_check_branch
    %15 = sbr.rel (0) target = $region13
  $region12: #{imgseq_autoencoder_forward.1} parent=0 // pred_region
    _
  $region13: #{imgseq_autoencoder_forward.1} parent=0 // pred_fallthru
    _
  // Predicated region
  $region14: #{imgseq_autoencoder_forward.1} parent=0 // pred_check
    _
  $region15: #{imgseq_autoencoder_forward.1} parent=0 // pred_check_branch
    %17 = sbr.rel (0) target = $region17
  $region16: #{imgseq_autoencoder_forward.1} parent=0 // pred_region
    _
  $region17: #{imgseq_autoencoder_forward.1} parent=0 // pred_fallthru
    _
  // Predicated region
  $region18: #{imgseq_autoencoder_forward.1} parent=0 // pred_check
    _
  $region19: #{imgseq_autoencoder_forward.1} parent=0 // pred_check_branch
    %19 = sbr.rel (0) target = $region21
  $region20: #{imgseq_autoencoder_forward.1} parent=0 // pred_region
    _
  $region21: #{imgseq_autoencoder_forward.1} parent=0 // pred_fallthru
    _
  %v21 = vld [vmem:[%s0] sm:$0xf]
  %v22 = vld [vmem:[%s1] sm:$0xf]
  %v23 = vld [vmem:[%s1 + $0x4] sm:$0xf]
  %v24 = vld [vmem:[%s1 + $0x8] sm:$0xf]
  %v25 = vld [vmem:[%s1 + $0xc] sm:$0xf]
  %v26 = vld [vmem:[%s1 + $0x10] sm:$0xf]
  %v27 = vld [vmem:[%s1 + $0x14] sm:$0xf]
  %v28 = vld [vmem:[%s1 + $0x18] sm:$0xf]
  %v29 = vld [vmem:[%s1 + $0x1c] sm:$0xf]
  %v30 = vld [vmem:[%s1 + $0x20] sm:$0xf]
  %v31 = vld [vmem:[%s1 + $0x24] sm:$0xf]
  %v32 = vld [vmem:[%s1 + $0x28] sm:$0xf]
  %v33 = vld [vmem:[%s1 + $0x2c] sm:$0xf]
  %v34 = vld [vmem:[%s1 + $0x30] sm:$0xf]
  %v35 = vld [vmem:[%s1 + $0x34] sm:$0xf]
  %v36 = vld [vmem:[%s1 + $0x38] sm:$0xf]
  %v37 = vld [vmem:[%s1 + $0x3c] sm:$0xf]
  %v38 = vld [vmem:[%s2] sm:$0x1]
  %v40 = vlaneseq
  %v41 = vshrl.u32 %v40, 7
  %v42 = vsub.s32 0, %v41
  %v43 = vrot.slane %v38, %v42
  %v61 = vunpack.c.l.b16 %v22
  %v62 = vunpack.c.l.b16 %v23
  %v63 = vunpack.c.l.b16 %v24
  %v64 = vunpack.c.l.b16 %v25
  %v65 = vunpack.c.l.b16 %v26
  %v66 = vunpack.c.l.b16 %v27
  %v67 = vunpack.c.l.b16 %v28
  %v68 = vunpack.c.l.b16 %v29
  %v69 = vunpack.c.l.b16 %v30
  %v70 = vunpack.c.l.b16 %v31
  %v71 = vunpack.c.l.b16 %v32
  %v72 = vunpack.c.l.b16 %v33
  %v73 = vunpack.c.l.b16 %v34
  %v74 = vunpack.c.l.b16 %v35
  %v75 = vunpack.c.l.b16 %v36
  %v76 = vunpack.c.l.b16 %v37
  %v77 = vpack.c.b16 %v62, %v61
  %v78 = vpack.c.b16 %v64, %v63
  %v79 = vpack.c.b16 %v66, %v65
  %v80 = vpack.c.b16 %v68, %v67
  %v81 = vpack.c.b16 %v70, %v69
  %v82 = vpack.c.b16 %v72, %v71
  %v83 = vpack.c.b16 %v74, %v73
  %v84 = vpack.c.b16 %v76, %v75
  %93 = vmatprep.subr.bf16.mxu0 0
  %94 = vmatpush1.bf16.msra.mxu0 %v77
  %95 = vmatprep.subr.bf16.mxu0 0
  %96 = vmatpush1.bf16.msra.mxu0 %v78
  %97 = vmatprep.subr.bf16.mxu0 0
  %98 = vmatpush1.bf16.msra.mxu0 %v79
  %99 = vmatprep.subr.bf16.mxu0 0
  %100 = vmatpush1.bf16.msra.mxu0 %v80
  %101 = vmatprep.subr.bf16.mxu0 0
  %102 = vmatpush1.bf16.msra.mxu0 %v81
  %103 = vmatprep.subr.bf16.mxu0 0
  %104 = vmatpush1.bf16.msra.mxu0 %v82
  %105 = vmatprep.subr.bf16.mxu0 0
  %106 = vmatpush1.bf16.msra.mxu0 %v83
  %107 = vmatprep.subr.bf16.mxu0 0
  %108 = vmatpush1.bf16.msra.mxu0 %v84
  %109 = vmatprep.subr.bf16.mxu0 0
  %110 = vmatpush1.bf16.msra.mxu0 0
  %111 = vmatprep.subr.bf16.mxu0 0
  %112 = vmatpush1.bf16.msra.mxu0 0
  %113 = vmatprep.subr.bf16.mxu0 0
  %114 = vmatpush1.bf16.msra.mxu0 0
  %115 = vmatprep.subr.bf16.mxu0 0
  %116 = vmatpush1.bf16.msra.mxu0 0
  %117 = vmatprep.subr.bf16.mxu0 0
  %118 = vmatpush1.bf16.msra.mxu0 0
  %119 = vmatprep.subr.bf16.mxu0 0
  %120 = vmatpush1.bf16.msra.mxu0 0
  %121 = vmatprep.subr.bf16.mxu0 0
  %122 = vmatpush1.bf16.msra.mxu0 0
  %123 = vmatprep.subr.bf16.mxu0 0
  %124 = vmatpush1.bf16.msra.mxu0 0
  %125 = vmatprep.mubr.bf16.mxu0 0
  %126 = vmatmul.mubr.bf16.gmra.mrb[0].mxu0 %v21
  %v127 = vpop.f32.mrb[0].mxu0
  %v128 = vadd.f32 %v43, %v127
  %v129 = vpop.f32.mrb[0].mxu0
  %v130 = vpop.f32.mrb[0].mxu0
  %v131 = vpop.f32.mrb[0].mxu0
  %132 = vdwg.mxu0
  %v133 = vmax.f32 %v128, 0.0
  %v134 = vpack.c.bf16 %v133, %v133
  %v135 = vld [vmem:[%s3] sm:$0xf]
  %v136 = vld [vmem:[%s3 + $0x4] sm:$0xf]
  %v137 = vld [vmem:[%s3 + $0x8] sm:$0xf]
  %v138 = vld [vmem:[%s3 + $0xc] sm:$0xf]
  %v139 = vld [vmem:[%s3 + $0x10] sm:$0xf]
  %v140 = vld [vmem:[%s3 + $0x14] sm:$0xf]
  %v141 = vld [vmem:[%s3 + $0x18] sm:$0xf]
  %v142 = vld [vmem:[%s3 + $0x1c] sm:$0xf]
  %v143 = vld [vmem:[%s3 + $0x20] sm:$0xf]
  %v144 = vld [vmem:[%s3 + $0x24] sm:$0xf]
  %v145 = vld [vmem:[%s3 + $0x28] sm:$0xf]
  %v146 = vld [vmem:[%s3 + $0x2c] sm:$0xf]
  %v147 = vld [vmem:[%s3 + $0x30] sm:$0xf]
  %v148 = vld [vmem:[%s3 + $0x34] sm:$0xf]
  %v149 = vld [vmem:[%s3 + $0x38] sm:$0xf]
  %v150 = vld [vmem:[%s3 + $0x3c] sm:$0xf]
  %v151 = vld [vmem:[%s4] sm:$0x1]
  %v153 = vlaneseq
  %v154 = vshrl.u32 %v153, 7
  %v155 = vsub.s32 0, %v154
  %v156 = vrot.slane %v151, %v155
  %v174 = vunpack.c.l.b16 %v135
  %v175 = vunpack.c.l.b16 %v136
  %v176 = vunpack.c.l.b16 %v137
  %v177 = vunpack.c.l.b16 %v138
  %v178 = vunpack.c.l.b16 %v139
  %v179 = vunpack.c.l.b16 %v140
  %v180 = vunpack.c.l.b16 %v141
  %v181 = vunpack.c.l.b16 %v142
  %v182 = vunpack.c.l.b16 %v143
  %v183 = vunpack.c.l.b16 %v144
  %v184 = vunpack.c.l.b16 %v145
  %v185 = vunpack.c.l.b16 %v146
  %v186 = vunpack.c.l.b16 %v147
  %v187 = vunpack.c.l.b16 %v148
  %v188 = vunpack.c.l.b16 %v149
  %v189 = vunpack.c.l.b16 %v150
  %v190 = vpack.c.b16 %v175, %v174
  %v191 = vpack.c.b16 %v177, %v176
  %v192 = vpack.c.b16 %v179, %v178
  %v193 = vpack.c.b16 %v181, %v180
  %v194 = vpack.c.b16 %v183, %v182
  %v195 = vpack.c.b16 %v185, %v184
  %v196 = vpack.c.b16 %v187, %v186
  %v197 = vpack.c.b16 %v189, %v188
  %206 = vmatprep.subr.bf16.mxu0 0
  %207 = vmatpush1.bf16.msra.mxu0 %v190
  %208 = vmatprep.subr.bf16.mxu0 0
  %209 = vmatpush1.bf16.msra.mxu0 %v191
  %210 = vmatprep.subr.bf16.mxu0 0
  %211 = vmatpush1.bf16.msra.mxu0 %v192
  %212 = vmatprep.subr.bf16.mxu0 0
  %213 = vmatpush1.bf16.msra.mxu0 %v193
  %214 = vmatprep.subr.bf16.mxu0 0
  %215 = vmatpush1.bf16.msra.mxu0 %v194
  %216 = vmatprep.subr.bf16.mxu0 0
  %217 = vmatpush1.bf16.msra.mxu0 %v195
  %218 = vmatprep.subr.bf16.mxu0 0
  %219 = vmatpush1.bf16.msra.mxu0 %v196
  %220 = vmatprep.subr.bf16.mxu0 0
  %221 = vmatpush1.bf16.msra.mxu0 %v197
  %222 = vmatprep.subr.bf16.mxu0 0
  %223 = vmatpush1.bf16.msra.mxu0 0
  %224 = vmatprep.subr.bf16.mxu0 0
  %225 = vmatpush1.bf16.msra.mxu0 0
  %226 = vmatprep.subr.bf16.mxu0 0
  %227 = vmatpush1.bf16.msra.mxu0 0
  %228 = vmatprep.subr.bf16.mxu0 0
  %229 = vmatpush1.bf16.msra.mxu0 0
  %230 = vmatprep.subr.bf16.mxu0 0
  %231 = vmatpush1.bf16.msra.mxu0 0
  %232 = vmatprep.subr.bf16.mxu0 0
  %233 = vmatpush1.bf16.msra.mxu0 0
  %234 = vmatprep.subr.bf16.mxu0 0
  %235 = vmatpush1.bf16.msra.mxu0 0
  %236 = vmatprep.subr.bf16.mxu0 0
  %237 = vmatpush1.bf16.msra.mxu0 0
  %238 = vmatprep.mubr.bf16.mxu0 0
  %239 = vmatmul.mubr.bf16.gmra.mrb[0].mxu0 %v134
  %v240 = vpop.f32.mrb[0].mxu0
  %v241 = vadd.f32 %v156, %v240
  %v242 = vpop.f32.mrb[0].mxu0
  %v243 = vpop.f32.mrb[0].mxu0
  %v244 = vpop.f32.mrb[0].mxu0
  %245 = vdwg.mxu0
  %246 = vst [vmem:[%s5] sm:$0xff] %v241
  // Predicated region
  $region22: #{imgseq_autoencoder_forward.1} parent=0 // pred_check
    _
  $region23: #{imgseq_autoencoder_forward.1} parent=0 // pred_check_branch
    %248 = sbr.rel (0) target = $region25
  $region24: #{imgseq_autoencoder_forward.1} parent=0 // pred_region
    _
  $region25: #{imgseq_autoencoder_forward.1} parent=0 // pred_fallthru
    _
  // Predicated region
  $region26: #{imgseq_autoencoder_forward.1} parent=0 // pred_check
    _
  $region27: #{imgseq_autoencoder_forward.1} parent=0 // pred_check_branch
    %250 = sbr.rel (0) target = $region29
  $region28: #{imgseq_autoencoder_forward.1} parent=0 // pred_region
    _
  $region29: #{imgseq_autoencoder_forward.1} parent=0 // pred_fallthru
    _

</llo_original>
